<compile_context>
chip_gen: v7x
topology: tpu7x:2x2x1
jax: 0.10.0
libtpu: 0.0.40
codegen_flags: <defaults>
</compile_context>

<pallas_src>
import jax
import jax.numpy as jnp
from jax.experimental import pallas as pl
from jax.experimental.pallas import tpu as pltpu


def _mean_pool_kernel(h_ref, m_ref, o_ref):
    h = h_ref[...]          # [TB, S, TD]  hidden states, native dtype
    m = m_ref[...]          # [TB, 1, S]   mask, same dtype as h, lane-dense over S
    # sum_s(mask * hidden) as a per-batch (1,S)x(S,TD) matmul -> MXU, f32 accumulation
    num = jnp.einsum('bms,bsd->bmd', m, h,
                     preferred_element_type=jnp.float32)              # [TB, 1, TD]
    # clamp(sum_s(mask), 1e-9); accumulate the count in f32
    den = jnp.maximum(
        jnp.sum(m.astype(jnp.float32), axis=2, keepdims=True), 1e-9)  # [TB, 1, 1]
    o_ref[...] = (num / den).astype(o_ref.dtype)


def _vmem_capacity_bytes():
    try:
        return int(pltpu.get_tpu_info().vmem_capacity_bytes)
    except Exception:
        return 64 * 1024 * 1024          # conservative default (v7x physical VMEM)


def _pick_blocks(B, S, D, itemsize, vmem_cap):
    """Pick (block_b, block_d) so the double-buffered h tile uses a big chunk of VMEM."""
    # Per-buffer budget for the hidden-state tile (the BlockSpec pipeline
    # double-buffers it; leave room for mask/out buffers + compiler scratch).
    budget = max(4 << 20, vmem_cap // 6)

    row_bytes_full = S * D * itemsize            # one batch element at full D
    if row_bytes_full <= budget or D % 128 != 0:
        # TODO(synk): if D is not a multiple of 128 AND a single (1,S,D) row
        # exceeds the budget, an S-axis reduction grid (f32 accumulator scratch
        # + pl.when init/finalize) would be needed to bound the tile further.
        block_d = D
    else:
        block_d = (budget // (S * itemsize)) // 128 * 128
        block_d = int(min(max(block_d, 128), D))

    row_bytes = S * block_d * itemsize
    block_b = int(max(1, budget // row_bytes))
    block_b = min(block_b, B)
    # Keep >= 2 grid steps on the (parallel) batch axis so both v7x TensorCores
    # get work; never collapse the grid to a single step when B allows it.
    if B >= 2:
        block_b = min(block_b, pl.cdiv(B, 2))
    return block_b, block_d


def mean_pooling(last_hidden_state, attention_mask):
    """Pallas equivalent of MeanPooling.forward(last_hidden_state, attention_mask)."""
    B, S, D = last_hidden_state.shape
    h = last_hidden_state                              # native dtype: no f32 upcast
    # lane-dense mask layout [B, 1, S]; 0/1 is exact in bf16 so match h's dtype
    m = attention_mask.reshape(B, 1, S).astype(h.dtype)

    itemsize = jnp.dtype(h.dtype).itemsize
    vmem_cap = _vmem_capacity_bytes()
    block_b, block_d = _pick_blocks(B, S, D, itemsize, vmem_cap)
    grid = (pl.cdiv(B, block_b), pl.cdiv(D, block_d))

    # Raise the scoped-VMEM limit to cover the double-buffered tiles (plus
    # headroom) while staying well inside physical VMEM.
    tile_bytes = block_b * (S * block_d * itemsize      # h tile
                            + S * itemsize              # mask tile
                            + block_d * 4)              # f32 out tile
    vmem_limit = int(min(vmem_cap * 3 // 4,
                         max(2 * tile_bytes + (8 << 20), 32 << 20)))
    vmem_limit = max(vmem_limit, 2 * tile_bytes + (4 << 20))

    out = pl.pallas_call(
        _mean_pool_kernel,
        out_shape=jax.ShapeDtypeStruct((B, 1, D), jnp.float32),
        grid=grid,
        in_specs=[pl.BlockSpec((block_b, S, block_d), lambda i, j: (i, 0, j)),
                  pl.BlockSpec((block_b, 1, S), lambda i, j: (i, 0, 0))],
        out_specs=pl.BlockSpec((block_b, 1, block_d), lambda i, j: (i, 0, j)),
        compiler_params=pltpu.CompilerParams(
            dimension_semantics=("parallel", "parallel"),
            vmem_limit_bytes=vmem_limit),
    )(h, m)
    return out.reshape(B, D)


if __name__ == "__main__":
    key = jax.random.PRNGKey(0)
    k_hidden, _ = jax.random.split(key)

    B, S, D = 2, 8, 32
    last_hidden_state = jax.random.normal(k_hidden, (B, S, D), dtype=jnp.float32)
    # padded sequences: lengths 6 and 5 (rest masked out), like the PyTorch path
    lengths = jnp.array([6, 5], dtype=jnp.int32)
    attention_mask = (jnp.arange(S)[None, :] < lengths[:, None]).astype(jnp.int32)

    pooled = jax.jit(mean_pooling)(last_hidden_state, attention_mask)
    pooled = jax.block_until_ready(pooled)

    # Pure-JAX reference with exact MeanPooling semantics.
    mask_f = attention_mask.astype(jnp.float32)[:, :, None]
    ref = jnp.sum(last_hidden_state * mask_f, axis=1) / jnp.maximum(
        jnp.sum(mask_f, axis=1), 1e-9)

    assert pooled.shape == (B, D) and pooled.dtype == jnp.float32
    assert bool(jnp.allclose(pooled, ref, rtol=1e-2, atol=1e-2)), (
        float(jnp.max(jnp.abs(pooled - ref))))

    # Also exercise the bf16 (no-upcast) path once.
    pooled_bf16 = jax.block_until_ready(
        jax.jit(mean_pooling)(last_hidden_state.astype(jnp.bfloat16),
                              attention_mask))
    assert pooled_bf16.shape == (B, D)
    assert bool(jnp.allclose(pooled_bf16, ref, rtol=5e-2, atol=5e-2))

    print("KERNEL_OK")
</pallas_src>

<mosaic_0001>
module attributes {stable_mosaic.version = 11 : i64} {
  func.func @_mean_pool_kernel(%arg0: i32, %arg1: i32, %arg2: memref<1x8x32xf32, #tpu.memory_space<vmem>>, %arg3: memref<1x1x8xf32, #tpu.memory_space<vmem>>, %arg4: memref<1x1x32xf32, #tpu.memory_space<vmem>>) attributes {dimension_semantics = [#tpu.dimension_semantics<parallel>, #tpu.dimension_semantics<parallel>], iteration_bounds = array<i64: 2, 1>, scalar_prefetch = 0 : i64, scratch_operands = 0 : i64, tpu.core_type = #tpu.core_type<tc>, window_params = [{transform_indices = @transform_0, window_bounds = array<i64: 1, 8, 32>}, {transform_indices = @transform_1, window_bounds = array<i64: 1, 1, 8>}, {transform_indices = @transform_2, window_bounds = array<i64: 1, 1, 32>}]} {
    %c0 = arith.constant 0 : index
    %c0_0 = arith.constant 0 : index
    %c0_1 = arith.constant 0 : index
    %0 = vector.load %arg2[%c0, %c0_0, %c0_1] : memref<1x8x32xf32, #tpu.memory_space<vmem>>, vector<1x8x32xf32>
    %c0_2 = arith.constant 0 : index
    %c0_3 = arith.constant 0 : index
    %c0_4 = arith.constant 0 : index
    %1 = vector.load %arg3[%c0_2, %c0_3, %c0_4] : memref<1x1x8xf32, #tpu.memory_space<vmem>>, vector<1x1x8xf32>
    "tpu.trace_start"() <{level = 10 : i32, message = "bms,bsd->bmd"}> : () -> ()
    %cst = arith.constant dense<0.000000e+00> : vector<1x1x32xf32>
    %2 = tpu.matmul %1, %0, %cst {dimension_numbers = #tpu.dot_dimension_numbers<[2], [1], [1], [2], [0, 0, 0, 1, 1, 2], [0], [0]>} : vector<1x1x8xf32>, vector<1x8x32xf32>, vector<1x1x32xf32> -> vector<1x1x32xf32>
    "tpu.trace_stop"() : () -> ()
    %cst_5 = arith.constant dense<0.000000e+00> : vector<1x1xf32>
    %3 = vector.multi_reduction <add>, %1, %cst_5 [2] : vector<1x1x8xf32> to vector<1x1xf32>
    %4 = vector.shape_cast %3 : vector<1x1xf32> to vector<1x1x1xf32>
    %cst_6 = arith.constant 9.99999971E-10 : f32
    %5 = vector.broadcast %cst_6 : f32 to vector<1x1x1xf32>
    %6 = arith.maximumf %4, %5 : vector<1x1x1xf32>
    %7 = vector.broadcast %6 : vector<1x1x1xf32> to vector<1x1x32xf32>
    %8 = arith.divf %2, %7 : vector<1x1x32xf32>
    %c0_7 = arith.constant 0 : index
    %c0_8 = arith.constant 0 : index
    %c0_9 = arith.constant 0 : index
    %9 = vector.load %arg4[%c0_7, %c0_8, %c0_9] : memref<1x1x32xf32, #tpu.memory_space<vmem>>, vector<1x1x32xf32>
    tpu.vector_store %arg4[%c0_7, %c0_8, %c0_9], %8 {strides = array<i32>} : memref<1x1x32xf32, #tpu.memory_space<vmem>>, vector<1x1x32xf32>,
    return
  }
  func.func @transform_0(%arg0: i32, %arg1: i32) -> (i32, i32, i32) {
    %c0_i32 = arith.constant 0 : i32
    %c0_i32_0 = arith.constant 0 : i32
    return %arg0, %c0_i32, %arg1 : i32, i32, i32
  }
  func.func @transform_1(%arg0: i32, %arg1: i32) -> (i32, i32, i32) {
    %c0_i32 = arith.constant 0 : i32
    %c0_i32_0 = arith.constant 0 : i32
    %c0_i32_1 = arith.constant 0 : i32
    return %arg0, %c0_i32, %c0_i32_0 : i32, i32, i32
  }
  func.func @transform_2(%arg0: i32, %arg1: i32) -> (i32, i32, i32) {
    %c0_i32 = arith.constant 0 : i32
    %c0_i32_0 = arith.constant 0 : i32
    return %arg0, %c0_i32, %arg1 : i32, i32, i32
  }
}

</mosaic_0001>

<llo_original>
// kernel: mean_pooling.1
$region0: #{mean_pooling.1}
  #allocation0 [shape = 'u32[]', space=smem, size = 0x4, offset = 0x4, fixed_abs, tag = 'smem constant byte address 0x4 - core index']
  #allocation1 [shape = 'u32[144,128]{1,0:T(1,128)}', space=vmem, size = 0x12000, scoped, tag = 'internal scratch']
  %s0 = inlined_call_operand.hbm [shape: f32[2,8,32], index: 0, kind: input, shape index: {}]
  %s1 = inlined_call_operand.vmem [shape: f32[2,1,8], index: 1, kind: input, shape index: {}]
  %s2 = inlined_call_operand.hbm [shape: f32[2,1,32], index: 2, kind: output, shape index: {}]
  %s3 = sld [smem:[#allocation0]]
  $region45: #{mean_pooling.1} parent=0
    _
  %s5 = ssub.s32 1, %s3
  %s6 = scalar_select 0, %s5, %s3
  $region1: #{mean_pooling.1} parent=0
    #allocation2 [shape = 'u8[8192]{0}', space=vmem, size = 0x2000, scoped, tag = 'input window, operand 0']
    #allocation3 [shape = 's32[2]{0}', space=sflag, size = 0x8, scoped, tag = 'scoped memory for mean_pooling.1']
    #allocation4 [shape = 's32[2]{0}', space=sflag, size = 0x8, scoped, tag = 'scoped memory for mean_pooling.1']
    #allocation5 [shape = 'u8[1024]{0}', space=vmem, size = 0x400, scoped, tag = 'output window, operand 0']
    %7 = vsyncpa [#allocation3], 0
    %s8 = scalar_lea.sflag [#allocation3], 1
    %9 = vsyncpa %s8, 0
    %10 = vsyncpa [#allocation4], 0
    %s11 = scalar_lea.sflag [#allocation4], 1
    %12 = vsyncpa %s11, 0
    loop: start=0, step=1, limit=4
    $region2: #{mean_pooling.1} parent=1 // loop_pre_header
      _
    $region3: #{mean_pooling.1} parent=1 // loop_header
      %s14 = sphi 0, %s18
      %p15 = scmp.ge.s32.totalorder %s14, 4
      %s21 = sphi 0, %s33
      %s22 = sphi 0, %s29
      %s23 = sphi 0, %s21
      %s24 = sphi 0, %s22
      %s25 = sphi 0, %s23
      %s26 = sphi 0, %s24
      %s38 = sphi 0, %s40
      %s41 = sphi 0, %s38
      %s42 = sphi 0, %s41
      %s58 = sphi 0, %s42
      %s64 = sphi 0, %s66
      %s67 = sphi 0, %s64
      %s68 = sphi 0, %s67
      %s84 = sphi 0, %s68
      %s92 = sphi 0, %s94
      %s95 = sphi 0, %s92
      %s96 = sphi 0, %s95
      %s112 = sphi 0, %s96
    $region4: #{mean_pooling.1} parent=1 // loop_header_branch
      %17 = sbr.rel (%p15) target = $region8
    $region5: #{mean_pooling.1} parent=1 // loop_body
      %s19 = ssub.s32 %s14, 1
      %s20 = ssub.s32 %s14, 2
      %s27 = sadd.s32 1, %s22
      %p28 = scmp.ge.s32.totalorder %s27, 1
      %s29 = scalar_select %p28, 0, %s27
      %s30 = sadd.s32 1, %s21
      %s31 = scalar_select %p28, %s30, %s21
      %p32 = scmp.ge.s32.totalorder %s31, 2
      %s33 = scalar_select %p32, 0, %s31
      %s34 = ssub.s32 %s21, %s33
      %s35 = ssub.s32 %s22, %s29
      %s36 = sor.u32 %s34, %s35
      %p37 = scmp.eq.s32.totalorder %s36, 0
      %s39 = sadd.s32 %s38, 1
      %s40 = scalar_select %p37, %s38, %s39
      %p43 = pneg %p37
      %p44 = scmp.eq.s32.totalorder %s14, 1
      %p45 = por %p43, %p44
      %p46 = scmp.ne.s32.totalorder %s38, %s41
      %p47 = scmp.eq.s32.totalorder %s14, 0
      %p48 = por %p46, %p47
      %p49 = scmp.ne.s32.totalorder %s38, %s41
      %p50 = scmp.eq.s32.totalorder %s19, 1
      %p51 = por %p49, %p50
      %p52 = scmp.ne.s32.totalorder %s41, %s42
      %p53 = scmp.eq.s32.totalorder %s19, 0
      %p54 = por %p52, %p53
      %p55 = scmp.ne.s32.totalorder %s41, %s42
      %p56 = scmp.eq.s32.totalorder %s20, 1
      %p57 = por %p55, %p56
      %p59 = scmp.ne.s32.totalorder %s42, %s58
      %p60 = scmp.eq.s32.totalorder %s20, 0
      %p61 = por %p59, %p60
      %s62 = ssub.s32 %s21, %s33
      %p63 = scmp.eq.s32.totalorder %s62, 0
      %s65 = sadd.s32 %s64, 1
      %s66 = scalar_select %p63, %s64, %s65
      %p69 = pneg %p63
      %p70 = scmp.eq.s32.totalorder %s14, 1
      %p71 = por %p69, %p70
      %p72 = scmp.ne.s32.totalorder %s64, %s67
      %p73 = scmp.eq.s32.totalorder %s14, 0
      %p74 = por %p72, %p73
      %p75 = scmp.ne.s32.totalorder %s64, %s67
      %p76 = scmp.eq.s32.totalorder %s19, 1
      %p77 = por %p75, %p76
      %p78 = scmp.ne.s32.totalorder %s67, %s68
      %p79 = scmp.eq.s32.totalorder %s19, 0
      %p80 = por %p78, %p79
      %p81 = scmp.ne.s32.totalorder %s67, %s68
      %p82 = scmp.eq.s32.totalorder %s20, 1
      %p83 = por %p81, %p82
      %p85 = scmp.ne.s32.totalorder %s68, %s84
      %p86 = scmp.eq.s32.totalorder %s20, 0
      %p87 = por %p85, %p86
      %s88 = ssub.s32 %s21, %s33
      %s89 = ssub.s32 %s22, %s29
      %s90 = sor.u32 %s88, %s89
      %p91 = scmp.eq.s32.totalorder %s90, 0
      %s93 = sadd.s32 %s92, 1
      %s94 = scalar_select %p91, %s92, %s93
      %p97 = pneg %p91
      %p98 = scmp.eq.s32.totalorder %s14, 1
      %p99 = por %p97, %p98
      %p100 = scmp.ne.s32.totalorder %s92, %s95
      %p101 = scmp.eq.s32.totalorder %s14, 0
      %p102 = por %p100, %p101
      %p103 = scmp.ne.s32.totalorder %s92, %s95
      %p104 = scmp.eq.s32.totalorder %s19, 1
      %p105 = por %p103, %p104
      %p106 = scmp.ne.s32.totalorder %s95, %s96
      %p107 = scmp.eq.s32.totalorder %s19, 0
      %p108 = por %p106, %p107
      %p109 = scmp.ne.s32.totalorder %s95, %s96
      %p110 = scmp.eq.s32.totalorder %s20, 1
      %p111 = por %p109, %p110
      %p113 = scmp.ne.s32.totalorder %s96, %s112
      %p114 = scmp.eq.s32.totalorder %s20, 0
      %p115 = por %p113, %p114
      %p116 = scmp.le.s32.totalorder 1, %s14
      %p117 = scmp.lt.s32.totalorder %s14, 3
      %p118 = pnand %p116, %p117
      %p119 = pneg %p118
      // Predicated region
      $region9: #{mean_pooling.1} parent=5 // pred_check
        _
      $region10: #{mean_pooling.1} parent=5 // pred_check_branch
        %121 = sbr.rel (%p118) target = $region12
      $region11: #{mean_pooling.1} parent=5 // pred_region
        %s122 = ssub.s32 %s14, 1
      $region12: #{mean_pooling.1} parent=5 // pred_fallthru
        _
      %p123 = scmp.lt.s32.totalorder %s14, 2
      // Predicated region
      $region13: #{mean_pooling.1} parent=5 // pred_check
        %p124 = pneg %p123
      $region14: #{mean_pooling.1} parent=5 // pred_check_branch
        %126 = sbr.rel (%p124) target = $region16
      $region15: #{mean_pooling.1} parent=5 // pred_region
        // Predicated region
        $region17: #{mean_pooling.1} parent=15 // pred_check
          %p127 = pneg %p48
        $region18: #{mean_pooling.1} parent=15 // pred_check_branch
          %129 = sbr.rel (%p127) target = $region20
        $region19: #{mean_pooling.1} parent=15 // pred_region
          %s130 = sand.u32 %s38, 1
          %s131 = scalar_lea.sflag [#allocation3], %s130
          %s132 = sand.u32 %s38, 1
          %s133 = smul.addr %s132, 8
          %s134 = scalar_lea.vmem [#allocation2], %s133
          %s136 = ssub.s32 128, 128
          %137 = vsyncadd %s131, %s136
          %s138 = sadd.s32 %s22, %s21
          %s139 = smul.addr %s138, 128
          %s140 = scalar_lea.hbm %s0, %s139
          %s142 = sshll.u32 %s134, 4
          %s143 = int_to_ptr.vmem [resolvable:$true] %s142
          %145 = dma.hbm_to_vmem [thread:$0]  %s140, 128, %s143, %s131
        $region20: #{mean_pooling.1} parent=15 // pred_fallthru
          _
        // Predicated region
        $region21: #{mean_pooling.1} parent=15 // pred_check
          %p146 = pneg %p74
        $region22: #{mean_pooling.1} parent=15 // pred_check_branch
          %148 = sbr.rel (%p146) target = $region24
        $region23: #{mean_pooling.1} parent=15 // pred_region
          %p149 = scmp.lt.s32.totalorder %s21, 1
          %s150 = scalar_select %p149, %s21, 1
          %s151 = scalar_lea.vmem %s1, %s150
        $region24: #{mean_pooling.1} parent=15 // pred_fallthru
          _
      $region16: #{mean_pooling.1} parent=5 // pred_fallthru
        _
      %p152 = scmp.le.s32.totalorder 1, %s14
      %p153 = scmp.lt.s32.totalorder %s14, 3
      %p154 = pnand %p152, %p153
      %p155 = pneg %p154
      // Predicated region
      $region25: #{mean_pooling.1} parent=5 // pred_check
        _
      $region26: #{mean_pooling.1} parent=5 // pred_check_branch
        %157 = sbr.rel (%p154) target = $region28
      $region27: #{mean_pooling.1} parent=5 // pred_region
        %s158 = ssub.s32 %s14, 1
        %s159 = sand.u32 %s41, 1
        %s160 = scalar_lea.sflag [#allocation3], %s159
        %s161 = sand.u32 %s41, 1
        %s162 = smul.addr %s161, 8
        %s163 = scalar_lea.vmem [#allocation2], %s162
        // Predicated region
        $region29: #{mean_pooling.1} parent=27 // pred_check
          %p164 = pneg %p54
        $region30: #{mean_pooling.1} parent=27 // pred_check_branch
          %166 = sbr.rel (%p164) target = $region32
        $region31: #{mean_pooling.1} parent=27 // pred_region
          %167 = dma.done %s160, 128
        $region32: #{mean_pooling.1} parent=27 // pred_fallthru
          _
        %s168 = sand.u32 %s41, 1
        %s169 = scalar_lea.sflag [#allocation3], %s168
        %s170 = sand.u32 %s41, 1
        %s171 = smul.addr %s170, 8
        %s172 = scalar_lea.vmem [#allocation2], %s171
        %p173 = pneg %p54
        %p174 = pneg %p51
        %p175 = scmp.lt.s32.totalorder %s23, 1
        %s176 = scalar_select %p175, %s23, 1
        %s177 = scalar_lea.vmem %s1, %s176
        %p178 = pneg %p80
        %p179 = pneg %p77
        %p180 = pneg %p108
        %p181 = pneg %p105
        %s182 = sand.u32 %s95, 1
        %s183 = scalar_lea.sflag [#allocation4], %s182
        %s184 = sand.u32 %s95, 1
        %s185 = scalar_lea.vmem [#allocation5], %s184
        %p186 = scmp.lt.s32.totalorder %s23, 1
        %s187 = scalar_select %p186, %s23, 1
        %s188 = scalar_lea.vmem %s1, %s187
        %v189 = vld [vmem:[%s163] sm:$0xff]
        %v190 = vld [vmem:[%s188] sm:$0x1]
        %vm191 = vcmask 64512
        %v193 = vsel %vm191, %v190, 0
        %195 = vmatprep.subr.mxu0 0.0
        %196 = vmatpush1.msra.mxu0 %v189
        %197 = vmatprep.subr.mxu0 0.0
        %198 = vmatpush1.msra.mxu0 0.0
        %199 = vmatprep.subr.mxu0 0.0
        %200 = vmatpush1.msra.mxu0 0.0
        %201 = vmatprep.subr.mxu0 0.0
        %202 = vmatpush1.msra.mxu0 0.0
        %203 = vmatprep.subr.mxu0 0.0
        %204 = vmatpush1.msra.mxu0 0.0
        %205 = vmatprep.subr.mxu0 0.0
        %206 = vmatpush1.msra.mxu0 0.0
        %207 = vmatprep.subr.mxu0 0.0
        %208 = vmatpush1.msra.mxu0 0.0
        %209 = vmatprep.subr.mxu0 0.0
        %210 = vmatpush1.msra.mxu0 0.0
        %211 = vmatprep.subr.mxu0 0.0
        %212 = vmatpush1.msra.mxu0 0.0
        %213 = vmatprep.subr.mxu0 0.0
        %214 = vmatpush1.msra.mxu0 0.0
        %215 = vmatprep.subr.mxu0 0.0
        %216 = vmatpush1.msra.mxu0 0.0
        %217 = vmatprep.subr.mxu0 0.0
        %218 = vmatpush1.msra.mxu0 0.0
        %219 = vmatprep.subr.mxu0 0.0
        %220 = vmatpush1.msra.mxu0 0.0
        %221 = vmatprep.subr.mxu0 0.0
        %222 = vmatpush1.msra.mxu0 0.0
        %223 = vmatprep.subr.mxu0 0.0
        %224 = vmatpush1.msra.mxu0 0.0
        %225 = vmatprep.subr.mxu0 0.0
        %226 = vmatpush1.msra.mxu0 0.0
        %227 = vmatprep.subr.mxu0 0.0
        %228 = vmatpush1.msra.mxu0 0.0
        %229 = vmatprep.subr.mxu0 0.0
        %230 = vmatpush1.msra.mxu0 0.0
        %231 = vmatprep.subr.mxu0 0.0
        %232 = vmatpush1.msra.mxu0 0.0
        %233 = vmatprep.subr.mxu0 0.0
        %234 = vmatpush1.msra.mxu0 0.0
        %235 = vmatprep.subr.mxu0 0.0
        %236 = vmatpush1.msra.mxu0 0.0
        %237 = vmatprep.subr.mxu0 0.0
        %238 = vmatpush1.msra.mxu0 0.0
        %239 = vmatprep.subr.mxu0 0.0
        %240 = vmatpush1.msra.mxu0 0.0
        %241 = vmatprep.subr.mxu0 0.0
        %242 = vmatpush1.msra.mxu0 0.0
        %243 = vmatprep.subr.mxu0 0.0
        %244 = vmatpush1.msra.mxu0 0.0
        %245 = vmatprep.subr.mxu0 0.0
        %246 = vmatpush1.msra.mxu0 0.0
        %247 = vmatprep.subr.mxu0 0.0
        %248 = vmatpush1.msra.mxu0 0.0
        %249 = vmatprep.subr.mxu0 0.0
        %250 = vmatpush1.msra.mxu0 0.0
        %251 = vmatprep.subr.mxu0 0.0
        %252 = vmatpush1.msra.mxu0 0.0
        %253 = vmatprep.subr.mxu0 0.0
        %254 = vmatpush1.msra.mxu0 0.0
        %255 = vmatprep.subr.mxu0 0.0
        %256 = vmatpush1.msra.mxu0 0.0
        %257 = vmatprep.subr.mxu0 0.0
        %258 = vmatpush1.msra.mxu0 0.0
        %259 = vmatprep.mubr.f32.mxu0 0.0
        %260 = vmatmul.mubr.f32.gmra.mrb[0].mxu0 %v193
        %v261 = vpop.f32.mrb[0].mxu0
        %v262 = vadd.f32 0.0, %v261
        %v263 = vpop.f32.mrb[0].mxu0
        %264 = vdwg.mxu0
        %vm265 = vcmask 57344
        %v266 = vsel %vm265, %v190, 0.0
        %267 = vadd.xlane.f32.xlu0 %v266
        %v268 = vpop.xlane.xlu0 %267
        %v269 = vmax.f32 %v268, 1e-09
        %v270 = vrcp.pop %v269
        %v271 = vmul.f32 %v262, %v270
        %vm272 = vcmask 253952
        %273 = vst.msk [vmem:[%s185] sm:$0x1] %vm272, %v271
        %s274 = sand.u32 %s95, 1
        %s275 = scalar_lea.sflag [#allocation4], %s274
        %s276 = sand.u32 %s95, 1
        %s277 = scalar_lea.vmem [#allocation5], %s276
        // Predicated region
        $region33: #{mean_pooling.1} parent=27 // pred_check
          %p278 = pneg %p105
        $region34: #{mean_pooling.1} parent=27 // pred_check_branch
          %280 = sbr.rel (%p278) target = $region36
        $region35: #{mean_pooling.1} parent=27 // pred_region
          %s282 = ssub.s32 16, 16
          %283 = vsyncadd %s275, %s282
          %s284 = sadd.s32 %s24, %s23
          %s285 = smul.addr %s284, 16
          %s286 = scalar_lea.hbm %s2, %s285
          %s288 = sshll.u32 %s277, 4
          %s289 = int_to_ptr.vmem [resolvable:$true] %s288
          %291 = dma.vmem_to_hbm [thread:$0]  %s289, 16, %s286, %s275
        $region36: #{mean_pooling.1} parent=27 // pred_fallthru
          _
      $region28: #{mean_pooling.1} parent=5 // pred_fallthru
        _
      %p292 = scmp.le.s32.totalorder 2, %s14
      // Predicated region
      $region37: #{mean_pooling.1} parent=5 // pred_check
        %p293 = pneg %p292
      $region38: #{mean_pooling.1} parent=5 // pred_check_branch
        %295 = sbr.rel (%p293) target = $region40
      $region39: #{mean_pooling.1} parent=5 // pred_region
        %s296 = ssub.s32 %s14, 2
        // Predicated region
        $region41: #{mean_pooling.1} parent=39 // pred_check
          %p297 = pneg %p111
        $region42: #{mean_pooling.1} parent=39 // pred_check_branch
          %299 = sbr.rel (%p297) target = $region44
        $region43: #{mean_pooling.1} parent=39 // pred_region
          %s300 = sand.u32 %s96, 1
          %s301 = scalar_lea.sflag [#allocation4], %s300
          %s302 = sand.u32 %s96, 1
          %s303 = scalar_lea.vmem [#allocation5], %s302
          %304 = dma.done %s301, 16
        $region44: #{mean_pooling.1} parent=39 // pred_fallthru
          _
      $region40: #{mean_pooling.1} parent=5 // pred_fallthru
        _
    $region6: #{mean_pooling.1} parent=1 // loop_footer
      %s18 = sadd.s32 1, %s14
    $region7: #{mean_pooling.1} parent=1 // loop_footer_branch
      %13 = sbr.rel target = $region3
    $region8: #{mean_pooling.1} parent=1 // loop_exit
      _
    %305 = vsyncpa [#allocation3], 1
    %s306 = scalar_lea.sflag [#allocation3], 1
    %307 = vsyncpa %s306, 1
    %308 = vsyncpa [#allocation4], 1
    %s309 = scalar_lea.sflag [#allocation4], 1
    %310 = vsyncpa %s309, 1

</llo_original>
